<compile_context>
chip_gen: v7x
topology: tpu7x:2x2x1
jax: 0.10.0
libtpu: 0.0.40
codegen_flags: <defaults>
</compile_context>

<pallas_src>
import functools

import jax
import jax.numpy as jnp
from jax.experimental import pallas as pl
from jax.experimental.pallas import tpu as pltpu

LN_EPS = 1e-5
N_PAD = 128  # lane-dense padding of the 3-wide output head


def _layernorm_fused(x, gamma, beta):
    """LayerNorm with one reduction pass: var = E[x^2] - mu^2 (biased, eps=1e-5)."""
    n = x.shape[-1]
    inv_n = 1.0 / n
    s = jnp.sum(x, axis=-1, keepdims=True)
    ss = jnp.sum(x * x, axis=-1, keepdims=True)
    mu = s * inv_n
    var = jnp.maximum(ss * inv_n - mu * mu, 0.0)  # guard tiny negative cancellation
    return (x - mu) * jax.lax.rsqrt(var + LN_EPS) * gamma + beta


def _mlp_kernel(x_ref,
                g1_ref, be1_ref,          # LayerNorm(dim)
                w1_ref, b1_ref,           # Linear(dim, H)       (W in bf16)
                g2_ref, be2_ref,          # LayerNorm(H)
                w2_ref, b2_ref,           # Linear(H, H)         (W in bf16)
                w3_ref, b3_ref,           # Linear(H, N_PAD)     (W in bf16, zero-padded)
                out_ref):
    x = x_ref[...]  # f32 (block_b, D)

    # LayerNorm(dim)  (f32)
    h = _layernorm_fused(x, g1_ref[...], be1_ref[...])

    # Linear(dim, H) + ReLU   (Dropout p=0.5 -> identity in eval)
    h = jnp.dot(h.astype(jnp.bfloat16), w1_ref[...],
                preferred_element_type=jnp.float32) + b1_ref[...]
    h = jnp.maximum(h, 0.0)
    # TODO(synk): training-mode dropout (random mask + 1/(1-p) scaling) not implemented; eval semantics used.

    # LayerNorm(H)  (f32)
    h = _layernorm_fused(h, g2_ref[...], be2_ref[...])

    # Linear(H, H) + ReLU   (Dropout p=0.5 -> identity in eval)
    h = jnp.dot(h.astype(jnp.bfloat16), w2_ref[...],
                preferred_element_type=jnp.float32) + b2_ref[...]
    h = jnp.maximum(h, 0.0)

    # Linear(H, N_PAD)  (columns >=3 are zero padding; sliced off in the wrapper)
    out = jnp.dot(h.astype(jnp.bfloat16), w3_ref[...],
                  preferred_element_type=jnp.float32) + b3_ref[...]
    out_ref[...] = out.astype(out_ref.dtype)


@functools.partial(jax.jit, static_argnames=("block_b",))
def cosine_normalizer_poly_offset_fwd(query_input, params, block_b=None):
    """Fused MLP head. query_input: (B, D) float32 -> guardrails: (B, 3) float32."""
    B, D = query_input.shape
    H = params["w1"].shape[1]
    n_out = params["w3"].shape[1]

    # --- batch tile: large for MXU M-dim utilization; keep >=2 grid steps when
    #     possible so v7x (2 TCs/chip) shards the parallel axis across cores.
    if block_b is None:
        if B >= 512:
            block_b = 256
        elif B >= 16:
            block_b = (((B + 1) // 2) + 7) // 8 * 8
        else:
            block_b = 8
    Bp = ((B + block_b - 1) // block_b) * block_b
    x = query_input.astype(jnp.float32)
    if Bp != B:
        x = jnp.pad(x, ((0, Bp - B), (0, 0)))

    # --- lane-dense output head: zero-pad (H,3)/(1,3) -> (H,128)/(1,128).
    w3p = jnp.zeros((H, N_PAD), params["w3"].dtype).at[:, :n_out].set(params["w3"])
    b3p = jnp.zeros((1, N_PAD), params["b3"].dtype).at[:, :n_out].set(params["b3"])

    # --- bf16 weights for the MXU (f32 accumulation inside the kernel).
    w1 = params["w1"].astype(jnp.bfloat16)
    w2 = params["w2"].astype(jnp.bfloat16)
    w3p = w3p.astype(jnp.bfloat16)

    # Grid-invariant operands: constant index_map => a single HBM->VMEM copy for
    # the whole grid (pipeline skips re-DMA when the block index is unchanged).
    def const2d(rows, cols):
        return pl.BlockSpec((rows, cols), lambda i: (0, 0))

    grid_spec = pltpu.PrefetchScalarGridSpec(
        num_scalar_prefetch=0,
        grid=(Bp // block_b,),
        in_specs=[
            pl.BlockSpec((block_b, D), lambda i: (i, 0)),   # x tile (pipelined)
            const2d(1, D), const2d(1, D),                   # LN1 gamma, beta
            const2d(D, H), const2d(1, H),                   # W1 (bf16), b1
            const2d(1, H), const2d(1, H),                   # LN2 gamma, beta
            const2d(H, H), const2d(1, H),                   # W2 (bf16), b2
            const2d(H, N_PAD), const2d(1, N_PAD),           # W3 (bf16, padded), b3
        ],
        out_specs=pl.BlockSpec((block_b, N_PAD), lambda i: (i, 0)),
    )

    out_padded = pl.pallas_call(
        _mlp_kernel,
        out_shape=jax.ShapeDtypeStruct((Bp, N_PAD), jnp.float32),
        grid_spec=grid_spec,
        compiler_params=pltpu.CompilerParams(
            dimension_semantics=("parallel",),
            vmem_limit_bytes=64 * 1024 * 1024,   # <= physical on v5e/v6e/v7x
        ),
    )(x,
      params["ln1_g"], params["ln1_b"],
      w1, params["b1"],
      params["ln2_g"], params["ln2_b"],
      w2, params["b2"],
      w3p, b3p)

    return out_padded[:B, :n_out]


def init_params(key, dim, hidden, n_out=3):
    """Deterministic parameter init mimicking the module's shapes (scaled down)."""
    ks = jax.random.split(key, 6)
    f32 = jnp.float32
    p = {
        "ln1_g": jnp.ones((1, dim), f32),
        "ln1_b": jnp.zeros((1, dim), f32),
        "w1": jax.random.normal(ks[0], (dim, hidden), f32) * (1.0 / jnp.sqrt(dim)),
        "b1": jax.random.normal(ks[1], (1, hidden), f32) * 0.01,
        "ln2_g": jnp.ones((1, hidden), f32),
        "ln2_b": jnp.zeros((1, hidden), f32),
        "w2": jax.random.normal(ks[2], (hidden, hidden), f32) * (1.0 / jnp.sqrt(hidden)),
        "b2": jax.random.normal(ks[3], (1, hidden), f32) * 0.01,
        "w3": jax.random.normal(ks[4], (hidden, n_out), f32) * (1.0 / jnp.sqrt(hidden)),
        "b3": jax.random.normal(ks[5], (1, n_out), f32) * 0.01,
        # scale_factor exists as a module parameter but is unused in forward().
        "scale_factor": jnp.asarray(10.0, f32),
    }
    return p


def reference_forward(query_input, params):
    """Pure-JAX f32 reference of the PyTorch forward (eval mode)."""
    def ln(x, g, b):
        mu = jnp.mean(x, axis=-1, keepdims=True)
        var = jnp.mean((x - mu) ** 2, axis=-1, keepdims=True)
        return (x - mu) * jax.lax.rsqrt(var + LN_EPS) * g + b

    x = query_input.astype(jnp.float32)
    h = ln(x, params["ln1_g"], params["ln1_b"])
    h = jnp.maximum(h @ params["w1"] + params["b1"], 0.0)
    h = ln(h, params["ln2_g"], params["ln2_b"])
    h = jnp.maximum(h @ params["w2"] + params["b2"], 0.0)
    return h @ params["w3"] + params["b3"]


if __name__ == "__main__":
    # Small shapes consistent with the module structure (dim scaled down from 768,
    # hidden scaled down from 3072, output fixed at 3).
    B, DIM, HIDDEN = 16, 32, 128
    key = jax.random.PRNGKey(0)
    k_x, k_p, k_item = jax.random.split(key, 3)

    query_input = jax.random.normal(k_x, (B, DIM), jnp.float32)
    item_input = jax.random.normal(k_item, (B, DIM), jnp.float32)
    params = init_params(k_p, DIM, HIDDEN)

    guardrails = cosine_normalizer_poly_offset_fwd(query_input, params)
    guardrails = jax.block_until_ready(guardrails)

    # GuardrailOutput-equivalent result.
    output = {"q_emb": query_input, "p_emb": item_input, "guardrails": guardrails}

    ref = reference_forward(query_input, params)
    assert output["guardrails"].shape == (B, 3)
    # bf16 MXU operands with f32 accumulation -> loosened tolerance vs f32 reference.
    assert jnp.allclose(output["guardrails"], ref, atol=5e-2, rtol=5e-2), "mismatch vs reference"

    print("KERNEL_OK")
</pallas_src>

<mosaic_0001>
module attributes {stable_mosaic.version = 11 : i64} {
  func.func @_mlp_kernel(%arg0: i32, %arg1: memref<8x32xf32, #tpu.memory_space<vmem>>, %arg2: memref<1x32xf32, #tpu.memory_space<vmem>>, %arg3: memref<1x32xf32, #tpu.memory_space<vmem>>, %arg4: memref<32x128xbf16, #tpu.memory_space<vmem>>, %arg5: memref<1x128xf32, #tpu.memory_space<vmem>>, %arg6: memref<1x128xf32, #tpu.memory_space<vmem>>, %arg7: memref<1x128xf32, #tpu.memory_space<vmem>>, %arg8: memref<128x128xbf16, #tpu.memory_space<vmem>>, %arg9: memref<1x128xf32, #tpu.memory_space<vmem>>, %arg10: memref<128x128xbf16, #tpu.memory_space<vmem>>, %arg11: memref<1x128xf32, #tpu.memory_space<vmem>>, %arg12: memref<8x128xf32, #tpu.memory_space<vmem>>) attributes {dimension_semantics = [#tpu.dimension_semantics<parallel>], iteration_bounds = array<i64: 2>, scalar_prefetch = 0 : i64, scratch_operands = 0 : i64, tpu.core_type = #tpu.core_type<tc>, window_params = [{transform_indices = @transform_0, window_bounds = array<i64: 8, 32>}, {pipeline_mode = #tpu.pipeline_mode<synchronous>, transform_indices = @transform_1, window_bounds = array<i64: 1, 32>}, {pipeline_mode = #tpu.pipeline_mode<synchronous>, transform_indices = @transform_2, window_bounds = array<i64: 1, 32>}, {pipeline_mode = #tpu.pipeline_mode<synchronous>, transform_indices = @transform_3, window_bounds = array<i64: 32, 128>}, {pipeline_mode = #tpu.pipeline_mode<synchronous>, transform_indices = @transform_4, window_bounds = array<i64: 1, 128>}, {pipeline_mode = #tpu.pipeline_mode<synchronous>, transform_indices = @transform_5, window_bounds = array<i64: 1, 128>}, {pipeline_mode = #tpu.pipeline_mode<synchronous>, transform_indices = @transform_6, window_bounds = array<i64: 1, 128>}, {pipeline_mode = #tpu.pipeline_mode<synchronous>, transform_indices = @transform_7, window_bounds = array<i64: 128, 128>}, {pipeline_mode = #tpu.pipeline_mode<synchronous>, transform_indices = @transform_8, window_bounds = array<i64: 1, 128>}, {pipeline_mode = #tpu.pipeline_mode<synchronous>, transform_indices = @transform_9, window_bounds = array<i64: 128, 128>}, {pipeline_mode = #tpu.pipeline_mode<synchronous>, transform_indices = @transform_10, window_bounds = array<i64: 1, 128>}, {transform_indices = @transform_11, window_bounds = array<i64: 8, 128>}]} {
    %c0 = arith.constant 0 : index
    %c0_0 = arith.constant 0 : index
    %0 = vector.load %arg1[%c0, %c0_0] : memref<8x32xf32, #tpu.memory_space<vmem>>, vector<8x32xf32>
    %c0_1 = arith.constant 0 : index
    %c0_2 = arith.constant 0 : index
    %1 = vector.load %arg2[%c0_1, %c0_2] : memref<1x32xf32, #tpu.memory_space<vmem>>, vector<1x32xf32>
    %c0_3 = arith.constant 0 : index
    %c0_4 = arith.constant 0 : index
    %2 = vector.load %arg3[%c0_3, %c0_4] : memref<1x32xf32, #tpu.memory_space<vmem>>, vector<1x32xf32>
    %cst = arith.constant dense<0.000000e+00> : vector<8xf32>
    %3 = vector.multi_reduction <add>, %0, %cst [1] : vector<8x32xf32> to vector<8xf32>
    %4 = vector.shape_cast %3 : vector<8xf32> to vector<8x1xf32>
    %5 = arith.mulf %0, %0 : vector<8x32xf32>
    %cst_5 = arith.constant dense<0.000000e+00> : vector<8xf32>
    %6 = vector.multi_reduction <add>, %5, %cst_5 [1] : vector<8x32xf32> to vector<8xf32>
    %7 = vector.shape_cast %6 : vector<8xf32> to vector<8x1xf32>
    %cst_6 = arith.constant 3.125000e-02 : f32
    %8 = vector.broadcast %cst_6 : f32 to vector<8x1xf32>
    %9 = arith.mulf %4, %8 : vector<8x1xf32>
    %cst_7 = arith.constant 3.125000e-02 : f32
    %10 = vector.broadcast %cst_7 : f32 to vector<8x1xf32>
    %11 = arith.mulf %7, %10 : vector<8x1xf32>
    %12 = arith.mulf %9, %9 : vector<8x1xf32>
    %13 = arith.subf %11, %12 : vector<8x1xf32>
    %cst_8 = arith.constant 0.000000e+00 : f32
    %14 = vector.broadcast %cst_8 : f32 to vector<8x1xf32>
    %15 = arith.maximumf %13, %14 : vector<8x1xf32>
    %16 = vector.broadcast %9 : vector<8x1xf32> to vector<8x32xf32>
    %17 = arith.subf %0, %16 : vector<8x32xf32>
    %cst_9 = arith.constant 9.99999974E-6 : f32
    %18 = vector.broadcast %cst_9 : f32 to vector<8x1xf32>
    %19 = arith.addf %15, %18 : vector<8x1xf32>
    %20 = math.rsqrt %19 : vector<8x1xf32>
    %21 = vector.broadcast %20 : vector<8x1xf32> to vector<8x32xf32>
    %22 = arith.mulf %17, %21 : vector<8x32xf32>
    %23 = vector.broadcast %1 : vector<1x32xf32> to vector<8x32xf32>
    %24 = arith.mulf %22, %23 : vector<8x32xf32>
    %25 = vector.broadcast %2 : vector<1x32xf32> to vector<8x32xf32>
    %26 = arith.addf %24, %25 : vector<8x32xf32>
    %27 = arith.truncf %26 : vector<8x32xf32> to vector<8x32xbf16>
    %c0_10 = arith.constant 0 : index
    %c0_11 = arith.constant 0 : index
    %28 = vector.load %arg4[%c0_10, %c0_11] : memref<32x128xbf16, #tpu.memory_space<vmem>>, vector<32x128xbf16>
    %cst_12 = arith.constant dense<0.000000e+00> : vector<8x128xf32>
    %29 = tpu.matmul %27, %28, %cst_12 {dimension_numbers = #tpu.dot_dimension_numbers<[1], [0], [0], [1], [0, 0, 1, 1], [], []>} : vector<8x32xbf16>, vector<32x128xbf16>, vector<8x128xf32> -> vector<8x128xf32>
    %c0_13 = arith.constant 0 : index
    %c0_14 = arith.constant 0 : index
    %30 = vector.load %arg5[%c0_13, %c0_14] : memref<1x128xf32, #tpu.memory_space<vmem>>, vector<1x128xf32>
    %31 = vector.broadcast %30 : vector<1x128xf32> to vector<8x128xf32>
    %32 = arith.addf %29, %31 : vector<8x128xf32>
    %cst_15 = arith.constant 0.000000e+00 : f32
    %33 = vector.broadcast %cst_15 : f32 to vector<8x128xf32>
    %34 = arith.maximumf %32, %33 : vector<8x128xf32>
    %c0_16 = arith.constant 0 : index
    %c0_17 = arith.constant 0 : index
    %35 = vector.load %arg6[%c0_16, %c0_17] : memref<1x128xf32, #tpu.memory_space<vmem>>, vector<1x128xf32>
    %c0_18 = arith.constant 0 : index
    %c0_19 = arith.constant 0 : index
    %36 = vector.load %arg7[%c0_18, %c0_19] : memref<1x128xf32, #tpu.memory_space<vmem>>, vector<1x128xf32>
    %cst_20 = arith.constant dense<0.000000e+00> : vector<8xf32>
    %37 = vector.multi_reduction <add>, %34, %cst_20 [1] : vector<8x128xf32> to vector<8xf32>
    %38 = vector.shape_cast %37 : vector<8xf32> to vector<8x1xf32>
    %39 = arith.mulf %34, %34 : vector<8x128xf32>
    %cst_21 = arith.constant dense<0.000000e+00> : vector<8xf32>
    %40 = vector.multi_reduction <add>, %39, %cst_21 [1] : vector<8x128xf32> to vector<8xf32>
    %41 = vector.shape_cast %40 : vector<8xf32> to vector<8x1xf32>
    %cst_22 = arith.constant 7.812500e-03 : f32
    %42 = vector.broadcast %cst_22 : f32 to vector<8x1xf32>
    %43 = arith.mulf %38, %42 : vector<8x1xf32>
    %cst_23 = arith.constant 7.812500e-03 : f32
    %44 = vector.broadcast %cst_23 : f32 to vector<8x1xf32>
    %45 = arith.mulf %41, %44 : vector<8x1xf32>
    %46 = arith.mulf %43, %43 : vector<8x1xf32>
    %47 = arith.subf %45, %46 : vector<8x1xf32>
    %cst_24 = arith.constant 0.000000e+00 : f32
    %48 = vector.broadcast %cst_24 : f32 to vector<8x1xf32>
    %49 = arith.maximumf %47, %48 : vector<8x1xf32>
    %50 = vector.broadcast %43 : vector<8x1xf32> to vector<8x128xf32>
    %51 = arith.subf %34, %50 : vector<8x128xf32>
    %cst_25 = arith.constant 9.99999974E-6 : f32
    %52 = vector.broadcast %cst_25 : f32 to vector<8x1xf32>
    %53 = arith.addf %49, %52 : vector<8x1xf32>
    %54 = math.rsqrt %53 : vector<8x1xf32>
    %55 = vector.broadcast %54 : vector<8x1xf32> to vector<8x128xf32>
    %56 = arith.mulf %51, %55 : vector<8x128xf32>
    %57 = vector.broadcast %35 : vector<1x128xf32> to vector<8x128xf32>
    %58 = arith.mulf %56, %57 : vector<8x128xf32>
    %59 = vector.broadcast %36 : vector<1x128xf32> to vector<8x128xf32>
    %60 = arith.addf %58, %59 : vector<8x128xf32>
    %61 = arith.truncf %60 : vector<8x128xf32> to vector<8x128xbf16>
    %c0_26 = arith.constant 0 : index
    %c0_27 = arith.constant 0 : index
    %62 = vector.load %arg8[%c0_26, %c0_27] : memref<128x128xbf16, #tpu.memory_space<vmem>>, vector<128x128xbf16>
    %cst_28 = arith.constant dense<0.000000e+00> : vector<8x128xf32>
    %63 = tpu.matmul %61, %62, %cst_28 {dimension_numbers = #tpu.dot_dimension_numbers<[1], [0], [0], [1], [0, 0, 1, 1], [], []>} : vector<8x128xbf16>, vector<128x128xbf16>, vector<8x128xf32> -> vector<8x128xf32>
    %c0_29 = arith.constant 0 : index
    %c0_30 = arith.constant 0 : index
    %64 = vector.load %arg9[%c0_29, %c0_30] : memref<1x128xf32, #tpu.memory_space<vmem>>, vector<1x128xf32>
    %65 = vector.broadcast %64 : vector<1x128xf32> to vector<8x128xf32>
    %66 = arith.addf %63, %65 : vector<8x128xf32>
    %cst_31 = arith.constant 0.000000e+00 : f32
    %67 = vector.broadcast %cst_31 : f32 to vector<8x128xf32>
    %68 = arith.maximumf %66, %67 : vector<8x128xf32>
    %69 = arith.truncf %68 : vector<8x128xf32> to vector<8x128xbf16>
    %c0_32 = arith.constant 0 : index
    %c0_33 = arith.constant 0 : index
    %70 = vector.load %arg10[%c0_32, %c0_33] : memref<128x128xbf16, #tpu.memory_space<vmem>>, vector<128x128xbf16>
    %cst_34 = arith.constant dense<0.000000e+00> : vector<8x128xf32>
    %71 = tpu.matmul %69, %70, %cst_34 {dimension_numbers = #tpu.dot_dimension_numbers<[1], [0], [0], [1], [0, 0, 1, 1], [], []>} : vector<8x128xbf16>, vector<128x128xbf16>, vector<8x128xf32> -> vector<8x128xf32>
    %c0_35 = arith.constant 0 : index
    %c0_36 = arith.constant 0 : index
    %72 = vector.load %arg11[%c0_35, %c0_36] : memref<1x128xf32, #tpu.memory_space<vmem>>, vector<1x128xf32>
    %73 = vector.broadcast %72 : vector<1x128xf32> to vector<8x128xf32>
    %74 = arith.addf %71, %73 : vector<8x128xf32>
    %c0_37 = arith.constant 0 : index
    %c0_38 = arith.constant 0 : index
    %75 = vector.load %arg12[%c0_37, %c0_38] : memref<8x128xf32, #tpu.memory_space<vmem>>, vector<8x128xf32>
    tpu.vector_store %arg12[%c0_37, %c0_38], %74 {strides = array<i32>} : memref<8x128xf32, #tpu.memory_space<vmem>>, vector<8x128xf32>,
    return
  }
  func.func @transform_0(%arg0: i32) -> (i32, i32) {
    %c0_i32 = arith.constant 0 : i32
    %c0_i32_0 = arith.constant 0 : i32
    return %arg0, %c0_i32 : i32, i32
  }
  func.func @transform_1(%arg0: i32) -> (i32, i32) {
    %c0_i32 = arith.constant 0 : i32
    %c0_i32_0 = arith.constant 0 : i32
    %c0_i32_1 = arith.constant 0 : i32
    return %c0_i32, %c0_i32_0 : i32, i32
  }
  func.func @transform_2(%arg0: i32) -> (i32, i32) {
    %c0_i32 = arith.constant 0 : i32
    %c0_i32_0 = arith.constant 0 : i32
    %c0_i32_1 = arith.constant 0 : i32
    return %c0_i32, %c0_i32_0 : i32, i32
  }
  func.func @transform_3(%arg0: i32) -> (i32, i32) {
    %c0_i32 = arith.constant 0 : i32
    %c0_i32_0 = arith.constant 0 : i32
    %c0_i32_1 = arith.constant 0 : i32
    return %c0_i32, %c0_i32_0 : i32, i32
  }
  func.func @transform_4(%arg0: i32) -> (i32, i32) {
    %c0_i32 = arith.constant 0 : i32
    %c0_i32_0 = arith.constant 0 : i32
    %c0_i32_1 = arith.constant 0 : i32
    return %c0_i32, %c0_i32_0 : i32, i32
  }
  func.func @transform_5(%arg0: i32) -> (i32, i32) {
    %c0_i32 = arith.constant 0 : i32
    %c0_i32_0 = arith.constant 0 : i32
    %c0_i32_1 = arith.constant 0 : i32
    return %c0_i32, %c0_i32_0 : i32, i32
  }
  func.func @transform_6(%arg0: i32) -> (i32, i32) {
    %c0_i32 = arith.constant 0 : i32
    %c0_i32_0 = arith.constant 0 : i32
    %c0_i32_1 = arith.constant 0 : i32
    return %c0_i32, %c0_i32_0 : i32, i32
  }
  func.func @transform_7(%arg0: i32) -> (i32, i32) {
    %c0_i32 = arith.constant 0 : i32
    %c0_i32_0 = arith.constant 0 : i32
    %c0_i32_1 = arith.constant 0 : i32
    return %c0_i32, %c0_i32_0 : i32, i32
  }
  func.func @transform_8(%arg0: i32) -> (i32, i32) {
    %c0_i32 = arith.constant 0 : i32
    %c0_i32_0 = arith.constant 0 : i32
    %c0_i32_1 = arith.constant 0 : i32
    return %c0_i32, %c0_i32_0 : i32, i32
  }
  func.func @transform_9(%arg0: i32) -> (i32, i32) {
    %c0_i32 = arith.constant 0 : i32
    %c0_i32_0 = arith.constant 0 : i32
    %c0_i32_1 = arith.constant 0 : i32
    return %c0_i32, %c0_i32_0 : i32, i32
  }
  func.func @transform_10(%arg0: i32) -> (i32, i32) {
    %c0_i32 = arith.constant 0 : i32
    %c0_i32_0 = arith.constant 0 : i32
    %c0_i32_1 = arith.constant 0 : i32
    return %c0_i32, %c0_i32_0 : i32, i32
  }
  func.func @transform_11(%arg0: i32) -> (i32, i32) {
    %c0_i32 = arith.constant 0 : i32
    %c0_i32_0 = arith.constant 0 : i32
    return %arg0, %c0_i32 : i32, i32
  }
}

</mosaic_0001>

<llo_original>
// kernel: cosine_normalizer_poly_offset_fwd.1
$region0: #{cosine_normalizer_poly_offset_fwd.1}
  #allocation0 [shape = 'u32[]', space=smem, size = 0x4, offset = 0x4, fixed_abs, tag = 'smem constant byte address 0x4 - core index']
  #allocation1 [shape = 'u32[144,128]{1,0:T(1,128)}', space=vmem, size = 0x12000, scoped, tag = 'internal scratch']
  %s0 = inlined_call_operand.hbm [shape: f32[16,32], index: 0, kind: input, shape index: {}]
  %s1 = inlined_call_operand.hbm [shape: f32[1,32], index: 1, kind: input, shape index: {}]
  %s2 = inlined_call_operand.hbm [shape: f32[1,32], index: 2, kind: input, shape index: {}]
  %s3 = inlined_call_operand.hbm [shape: bf16[32,128], index: 3, kind: input, shape index: {}]
  %s4 = inlined_call_operand.hbm [shape: f32[1,128], index: 4, kind: input, shape index: {}]
  %s5 = inlined_call_operand.hbm [shape: f32[1,128], index: 5, kind: input, shape index: {}]
  %s6 = inlined_call_operand.hbm [shape: f32[1,128], index: 6, kind: input, shape index: {}]
  %s7 = inlined_call_operand.hbm [shape: bf16[128,128], index: 7, kind: input, shape index: {}]
  %s8 = inlined_call_operand.hbm [shape: f32[1,128], index: 8, kind: input, shape index: {}]
  %s9 = inlined_call_operand.hbm [shape: bf16[128,128], index: 9, kind: input, shape index: {}]
  %s10 = inlined_call_operand.hbm [shape: f32[1,128], index: 10, kind: input, shape index: {}]
  %s11 = inlined_call_operand.hbm [shape: f32[16,128], index: 11, kind: output, shape index: {}]
  %s12 = sld [smem:[#allocation0]]
  $region121: #{cosine_normalizer_poly_offset_fwd.1} parent=0
    _
  %s14 = ssub.s32 1, %s12
  %s15 = scalar_select 0, %s14, %s12
  $region1: #{cosine_normalizer_poly_offset_fwd.1} parent=0
    #allocation2 [shape = 'u8[8192]{0}', space=vmem, size = 0x2000, scoped, tag = 'input window, operand 0']
    #allocation3 [shape = 's32[2]{0}', space=sflag, size = 0x8, scoped, tag = 'scoped memory for cosine_normalizer_poly_offset_fwd.1']
    #allocation4 [shape = 's32[2]{0}', space=sflag, size = 0x8, scoped, tag = 'scoped memory for cosine_normalizer_poly_offset_fwd.1']
    #allocation5 [shape = 'u8[512]{0}', space=vmem, size = 0x400, scoped, tag = 'input window, operand 1, single buffered']
    #allocation6 [shape = 's32[1]{0}', space=sflag, size = 0x4, scoped, tag = 'scoped memory for cosine_normalizer_poly_offset_fwd.1']
    #allocation7 [shape = 'u8[512]{0}', space=vmem, size = 0x400, scoped, tag = 'input window, operand 2, single buffered']
    #allocation8 [shape = 'u8[8192]{0}', space=vmem, size = 0x2000, scoped, tag = 'input window, operand 3, single buffered']
    #allocation9 [shape = 's32[1]{0}', space=sflag, size = 0x4, scoped, tag = 'scoped memory for cosine_normalizer_poly_offset_fwd.1']
    #allocation10 [shape = 'u8[512]{0}', space=vmem, size = 0x400, scoped, tag = 'input window, operand 4, single buffered']
    #allocation11 [shape = 'u8[512]{0}', space=vmem, size = 0x400, scoped, tag = 'input window, operand 5, single buffered']
    #allocation12 [shape = 's32[1]{0}', space=sflag, size = 0x4, scoped, tag = 'scoped memory for cosine_normalizer_poly_offset_fwd.1']
    #allocation13 [shape = 'u8[512]{0}', space=vmem, size = 0x400, scoped, tag = 'input window, operand 6, single buffered']
    #allocation14 [shape = 'u8[32768]{0}', space=vmem, size = 0x8000, scoped, tag = 'input window, operand 7, single buffered']
    #allocation15 [shape = 's32[1]{0}', space=sflag, size = 0x4, scoped, tag = 'scoped memory for cosine_normalizer_poly_offset_fwd.1']
    #allocation16 [shape = 'u8[512]{0}', space=vmem, size = 0x400, scoped, tag = 'input window, operand 8, single buffered']
    #allocation17 [shape = 'u8[32768]{0}', space=vmem, size = 0x8000, scoped, tag = 'input window, operand 9, single buffered']
    #allocation18 [shape = 's32[1]{0}', space=sflag, size = 0x4, scoped, tag = 'scoped memory for cosine_normalizer_poly_offset_fwd.1']
    #allocation19 [shape = 'u8[512]{0}', space=vmem, size = 0x400, scoped, tag = 'input window, operand 10, single buffered']
    #allocation20 [shape = 'u8[8192]{0}', space=vmem, size = 0x2000, scoped, tag = 'output window, operand 0']
    %16 = vsyncpa [#allocation3], 0
    %s17 = scalar_lea.sflag [#allocation3], 1
    %18 = vsyncpa %s17, 0
    %19 = vsyncpa [#allocation6], 0
    %20 = vsyncpa [#allocation9], 0
    %21 = vsyncpa [#allocation12], 0
    %22 = vsyncpa [#allocation15], 0
    %23 = vsyncpa [#allocation18], 0
    %24 = vsyncpa [#allocation4], 0
    %s25 = scalar_lea.sflag [#allocation4], 1
    %26 = vsyncpa %s25, 0
    loop: start=0, step=1, limit=4
    $region2: #{cosine_normalizer_poly_offset_fwd.1} parent=1 // loop_pre_header
      _
    $region3: #{cosine_normalizer_poly_offset_fwd.1} parent=1 // loop_header
      %s28 = sphi 0, %s32
      %p29 = scmp.ge.s32.totalorder %s28, 4
      %s38 = sphi 0, %s40
      %s41 = sphi 0, %s38
      %s42 = sphi 0, %s41
      %s58 = sphi 0, %s42
      %s62 = sphi 0, %s62
      %s64 = sphi 0, %s62
      %s65 = sphi 0, %s64
      %s79 = sphi 0, %s65
      %s83 = sphi 0, %s83
      %s85 = sphi 0, %s83
      %s86 = sphi 0, %s85
      %s100 = sphi 0, %s86
      %s104 = sphi 0, %s104
      %s106 = sphi 0, %s104
      %s107 = sphi 0, %s106
      %s121 = sphi 0, %s107
      %s125 = sphi 0, %s125
      %s127 = sphi 0, %s125
      %s128 = sphi 0, %s127
      %s142 = sphi 0, %s128
      %s146 = sphi 0, %s146
      %s148 = sphi 0, %s146
      %s149 = sphi 0, %s148
      %s163 = sphi 0, %s149
      %s167 = sphi 0, %s167
      %s169 = sphi 0, %s167
      %s170 = sphi 0, %s169
      %s184 = sphi 0, %s170
      %s188 = sphi 0, %s188
      %s190 = sphi 0, %s188
      %s191 = sphi 0, %s190
      %s205 = sphi 0, %s191
      %s209 = sphi 0, %s209
      %s211 = sphi 0, %s209
      %s212 = sphi 0, %s211
      %s226 = sphi 0, %s212
      %s230 = sphi 0, %s230
      %s232 = sphi 0, %s230
      %s233 = sphi 0, %s232
      %s247 = sphi 0, %s233
      %s251 = sphi 0, %s251
      %s253 = sphi 0, %s251
      %s254 = sphi 0, %s253
      %s268 = sphi 0, %s254
      %s274 = sphi 0, %s276
      %s277 = sphi 0, %s274
      %s278 = sphi 0, %s277
      %s294 = sphi 0, %s278
    $region4: #{cosine_normalizer_poly_offset_fwd.1} parent=1 // loop_header_branch
      %31 = sbr.rel (%p29) target = $region8
    $region5: #{cosine_normalizer_poly_offset_fwd.1} parent=1 // loop_body
      %s33 = ssub.s32 %s28, 1
      %s34 = ssub.s32 %s28, 2
      %s35 = sadd.s32 %s28, 1
      %s36 = ssub.s32 %s28, %s35
      %p37 = scmp.eq.s32.totalorder %s36, 0
      %s39 = sadd.s32 %s38, 1
      %s40 = scalar_select %p37, %s38, %s39
      %p43 = pneg %p37
      %p44 = scmp.eq.s32.totalorder %s28, 1
      %p45 = por %p43, %p44
      %p46 = scmp.ne.s32.totalorder %s38, %s41
      %p47 = scmp.eq.s32.totalorder %s28, 0
      %p48 = por %p46, %p47
      %p49 = scmp.ne.s32.totalorder %s38, %s41
      %p50 = scmp.eq.s32.totalorder %s33, 1
      %p51 = por %p49, %p50
      %p52 = scmp.ne.s32.totalorder %s41, %s42
      %p53 = scmp.eq.s32.totalorder %s33, 0
      %p54 = por %p52, %p53
      %p55 = scmp.ne.s32.totalorder %s41, %s42
      %p56 = scmp.eq.s32.totalorder %s34, 1
      %p57 = por %p55, %p56
      %p59 = scmp.ne.s32.totalorder %s42, %s58
      %p60 = scmp.eq.s32.totalorder %s34, 0
      %p61 = por %p59, %p60
      %s63 = sadd.s32 %s62, 1
      %p66 = scmp.eq.s32.totalorder %s28, 1
      %p67 = scmp.ne.s32.totalorder %s62, %s64
      %p68 = scmp.eq.s32.totalorder %s28, 0
      %p69 = por %p67, %p68
      %p70 = scmp.ne.s32.totalorder %s62, %s64
      %p71 = scmp.eq.s32.totalorder %s33, 1
      %p72 = por %p70, %p71
      %p73 = scmp.ne.s32.totalorder %s64, %s65
      %p74 = scmp.eq.s32.totalorder %s33, 0
      %p75 = por %p73, %p74
      %p76 = scmp.ne.s32.totalorder %s64, %s65
      %p77 = scmp.eq.s32.totalorder %s34, 1
      %p78 = por %p76, %p77
      %p80 = scmp.ne.s32.totalorder %s65, %s79
      %p81 = scmp.eq.s32.totalorder %s34, 0
      %p82 = por %p80, %p81
      %s84 = sadd.s32 %s83, 1
      %p87 = scmp.eq.s32.totalorder %s28, 1
      %p88 = scmp.ne.s32.totalorder %s83, %s85
      %p89 = scmp.eq.s32.totalorder %s28, 0
      %p90 = por %p88, %p89
      %p91 = scmp.ne.s32.totalorder %s83, %s85
      %p92 = scmp.eq.s32.totalorder %s33, 1
      %p93 = por %p91, %p92
      %p94 = scmp.ne.s32.totalorder %s85, %s86
      %p95 = scmp.eq.s32.totalorder %s33, 0
      %p96 = por %p94, %p95
      %p97 = scmp.ne.s32.totalorder %s85, %s86
      %p98 = scmp.eq.s32.totalorder %s34, 1
      %p99 = por %p97, %p98
      %p101 = scmp.ne.s32.totalorder %s86, %s100
      %p102 = scmp.eq.s32.totalorder %s34, 0
      %p103 = por %p101, %p102
      %s105 = sadd.s32 %s104, 1
      %p108 = scmp.eq.s32.totalorder %s28, 1
      %p109 = scmp.ne.s32.totalorder %s104, %s106
      %p110 = scmp.eq.s32.totalorder %s28, 0
      %p111 = por %p109, %p110
      %p112 = scmp.ne.s32.totalorder %s104, %s106
      %p113 = scmp.eq.s32.totalorder %s33, 1
      %p114 = por %p112, %p113
      %p115 = scmp.ne.s32.totalorder %s106, %s107
      %p116 = scmp.eq.s32.totalorder %s33, 0
      %p117 = por %p115, %p116
      %p118 = scmp.ne.s32.totalorder %s106, %s107
      %p119 = scmp.eq.s32.totalorder %s34, 1
      %p120 = por %p118, %p119
      %p122 = scmp.ne.s32.totalorder %s107, %s121
      %p123 = scmp.eq.s32.totalorder %s34, 0
      %p124 = por %p122, %p123
      %s126 = sadd.s32 %s125, 1
      %p129 = scmp.eq.s32.totalorder %s28, 1
      %p130 = scmp.ne.s32.totalorder %s125, %s127
      %p131 = scmp.eq.s32.totalorder %s28, 0
      %p132 = por %p130, %p131
      %p133 = scmp.ne.s32.totalorder %s125, %s127
      %p134 = scmp.eq.s32.totalorder %s33, 1
      %p135 = por %p133, %p134
      %p136 = scmp.ne.s32.totalorder %s127, %s128
      %p137 = scmp.eq.s32.totalorder %s33, 0
      %p138 = por %p136, %p137
      %p139 = scmp.ne.s32.totalorder %s127, %s128
      %p140 = scmp.eq.s32.totalorder %s34, 1
      %p141 = por %p139, %p140
      %p143 = scmp.ne.s32.totalorder %s128, %s142
      %p144 = scmp.eq.s32.totalorder %s34, 0
      %p145 = por %p143, %p144
      %s147 = sadd.s32 %s146, 1
      %p150 = scmp.eq.s32.totalorder %s28, 1
      %p151 = scmp.ne.s32.totalorder %s146, %s148
      %p152 = scmp.eq.s32.totalorder %s28, 0
      %p153 = por %p151, %p152
      %p154 = scmp.ne.s32.totalorder %s146, %s148
      %p155 = scmp.eq.s32.totalorder %s33, 1
      %p156 = por %p154, %p155
      %p157 = scmp.ne.s32.totalorder %s148, %s149
      %p158 = scmp.eq.s32.totalorder %s33, 0
      %p159 = por %p157, %p158
      %p160 = scmp.ne.s32.totalorder %s148, %s149
      %p161 = scmp.eq.s32.totalorder %s34, 1
      %p162 = por %p160, %p161
      %p164 = scmp.ne.s32.totalorder %s149, %s163
      %p165 = scmp.eq.s32.totalorder %s34, 0
      %p166 = por %p164, %p165
      %s168 = sadd.s32 %s167, 1
      %p171 = scmp.eq.s32.totalorder %s28, 1
      %p172 = scmp.ne.s32.totalorder %s167, %s169
      %p173 = scmp.eq.s32.totalorder %s28, 0
      %p174 = por %p172, %p173
      %p175 = scmp.ne.s32.totalorder %s167, %s169
      %p176 = scmp.eq.s32.totalorder %s33, 1
      %p177 = por %p175, %p176
      %p178 = scmp.ne.s32.totalorder %s169, %s170
      %p179 = scmp.eq.s32.totalorder %s33, 0
      %p180 = por %p178, %p179
      %p181 = scmp.ne.s32.totalorder %s169, %s170
      %p182 = scmp.eq.s32.totalorder %s34, 1
      %p183 = por %p181, %p182
      %p185 = scmp.ne.s32.totalorder %s170, %s184
      %p186 = scmp.eq.s32.totalorder %s34, 0
      %p187 = por %p185, %p186
      %s189 = sadd.s32 %s188, 1
      %p192 = scmp.eq.s32.totalorder %s28, 1
      %p193 = scmp.ne.s32.totalorder %s188, %s190
      %p194 = scmp.eq.s32.totalorder %s28, 0
      %p195 = por %p193, %p194
      %p196 = scmp.ne.s32.totalorder %s188, %s190
      %p197 = scmp.eq.s32.totalorder %s33, 1
      %p198 = por %p196, %p197
      %p199 = scmp.ne.s32.totalorder %s190, %s191
      %p200 = scmp.eq.s32.totalorder %s33, 0
      %p201 = por %p199, %p200
      %p202 = scmp.ne.s32.totalorder %s190, %s191
      %p203 = scmp.eq.s32.totalorder %s34, 1
      %p204 = por %p202, %p203
      %p206 = scmp.ne.s32.totalorder %s191, %s205
      %p207 = scmp.eq.s32.totalorder %s34, 0
      %p208 = por %p206, %p207
      %s210 = sadd.s32 %s209, 1
      %p213 = scmp.eq.s32.totalorder %s28, 1
      %p214 = scmp.ne.s32.totalorder %s209, %s211
      %p215 = scmp.eq.s32.totalorder %s28, 0
      %p216 = por %p214, %p215
      %p217 = scmp.ne.s32.totalorder %s209, %s211
      %p218 = scmp.eq.s32.totalorder %s33, 1
      %p219 = por %p217, %p218
      %p220 = scmp.ne.s32.totalorder %s211, %s212
      %p221 = scmp.eq.s32.totalorder %s33, 0
      %p222 = por %p220, %p221
      %p223 = scmp.ne.s32.totalorder %s211, %s212
      %p224 = scmp.eq.s32.totalorder %s34, 1
      %p225 = por %p223, %p224
      %p227 = scmp.ne.s32.totalorder %s212, %s226
      %p228 = scmp.eq.s32.totalorder %s34, 0
      %p229 = por %p227, %p228
      %s231 = sadd.s32 %s230, 1
      %p234 = scmp.eq.s32.totalorder %s28, 1
      %p235 = scmp.ne.s32.totalorder %s230, %s232
      %p236 = scmp.eq.s32.totalorder %s28, 0
      %p237 = por %p235, %p236
      %p238 = scmp.ne.s32.totalorder %s230, %s232
      %p239 = scmp.eq.s32.totalorder %s33, 1
      %p240 = por %p238, %p239
      %p241 = scmp.ne.s32.totalorder %s232, %s233
      %p242 = scmp.eq.s32.totalorder %s33, 0
      %p243 = por %p241, %p242
      %p244 = scmp.ne.s32.totalorder %s232, %s233
      %p245 = scmp.eq.s32.totalorder %s34, 1
      %p246 = por %p244, %p245
      %p248 = scmp.ne.s32.totalorder %s233, %s247
      %p249 = scmp.eq.s32.totalorder %s34, 0
      %p250 = por %p248, %p249
      %s252 = sadd.s32 %s251, 1
      %p255 = scmp.eq.s32.totalorder %s28, 1
      %p256 = scmp.ne.s32.totalorder %s251, %s253
      %p257 = scmp.eq.s32.totalorder %s28, 0
      %p258 = por %p256, %p257
      %p259 = scmp.ne.s32.totalorder %s251, %s253
      %p260 = scmp.eq.s32.totalorder %s33, 1
      %p261 = por %p259, %p260
      %p262 = scmp.ne.s32.totalorder %s253, %s254
      %p263 = scmp.eq.s32.totalorder %s33, 0
      %p264 = por %p262, %p263
      %p265 = scmp.ne.s32.totalorder %s253, %s254
      %p266 = scmp.eq.s32.totalorder %s34, 1
      %p267 = por %p265, %p266
      %p269 = scmp.ne.s32.totalorder %s254, %s268
      %p270 = scmp.eq.s32.totalorder %s34, 0
      %p271 = por %p269, %p270
      %s272 = ssub.s32 %s28, %s35
      %p273 = scmp.eq.s32.totalorder %s272, 0
      %s275 = sadd.s32 %s274, 1
      %s276 = scalar_select %p273, %s274, %s275
      %p279 = pneg %p273
      %p280 = scmp.eq.s32.totalorder %s28, 1
      %p281 = por %p279, %p280
      %p282 = scmp.ne.s32.totalorder %s274, %s277
      %p283 = scmp.eq.s32.totalorder %s28, 0
      %p284 = por %p282, %p283
      %p285 = scmp.ne.s32.totalorder %s274, %s277
      %p286 = scmp.eq.s32.totalorder %s33, 1
      %p287 = por %p285, %p286
      %p288 = scmp.ne.s32.totalorder %s277, %s278
      %p289 = scmp.eq.s32.totalorder %s33, 0
      %p290 = por %p288, %p289
      %p291 = scmp.ne.s32.totalorder %s277, %s278
      %p292 = scmp.eq.s32.totalorder %s34, 1
      %p293 = por %p291, %p292
      %p295 = scmp.ne.s32.totalorder %s278, %s294
      %p296 = scmp.eq.s32.totalorder %s34, 0
      %p297 = por %p295, %p296
      %p298 = scmp.le.s32.totalorder 1, %s28
      %p299 = scmp.lt.s32.totalorder %s28, 3
      %p300 = pnand %p298, %p299
      %p301 = pneg %p300
      // Predicated region
      $region9: #{cosine_normalizer_poly_offset_fwd.1} parent=5 // pred_check
        _
      $region10: #{cosine_normalizer_poly_offset_fwd.1} parent=5 // pred_check_branch
        %303 = sbr.rel (%p300) target = $region12
      $region11: #{cosine_normalizer_poly_offset_fwd.1} parent=5 // pred_region
        %s304 = ssub.s32 %s28, 1
        // Predicated region
        $region13: #{cosine_normalizer_poly_offset_fwd.1} parent=11 // pred_check
          %p305 = pneg %p75
        $region14: #{cosine_normalizer_poly_offset_fwd.1} parent=11 // pred_check_branch
          %307 = sbr.rel (%p305) target = $region16
        $region15: #{cosine_normalizer_poly_offset_fwd.1} parent=11 // pred_region
          %s309 = ssub.s32 16, 16
          %310 = vsyncadd [#allocation6], %s309
          %s312 = sshll.u32 [#allocation5], 4
          %s313 = int_to_ptr.vmem [resolvable:$true] %s312
          %315 = dma.hbm_to_vmem [thread:$0]  %s1, 16, %s313, [#allocation6]
        $region16: #{cosine_normalizer_poly_offset_fwd.1} parent=11 // pred_fallthru
          _
        // Predicated region
        $region17: #{cosine_normalizer_poly_offset_fwd.1} parent=11 // pred_check
          %p316 = pneg %p96
        $region18: #{cosine_normalizer_poly_offset_fwd.1} parent=11 // pred_check_branch
          %318 = sbr.rel (%p316) target = $region20
        $region19: #{cosine_normalizer_poly_offset_fwd.1} parent=11 // pred_region
          %s320 = ssub.s32 16, 16
          %321 = vsyncadd [#allocation6], %s320
          %s323 = sshll.u32 [#allocation7], 4
          %s324 = int_to_ptr.vmem [resolvable:$true] %s323
          %326 = dma.hbm_to_vmem [thread:$0]  %s2, 16, %s324, [#allocation6]
        $region20: #{cosine_normalizer_poly_offset_fwd.1} parent=11 // pred_fallthru
          _
        // Predicated region
        $region21: #{cosine_normalizer_poly_offset_fwd.1} parent=11 // pred_check
          %p327 = pneg %p117
        $region22: #{cosine_normalizer_poly_offset_fwd.1} parent=11 // pred_check_branch
          %329 = sbr.rel (%p327) target = $region24
        $region23: #{cosine_normalizer_poly_offset_fwd.1} parent=11 // pred_region
          %s331 = ssub.s32 256, 256
          %332 = vsyncadd [#allocation9], %s331
          %s333 = sshll.u32 [#allocation8], 4
          %s334 = int_to_ptr.vmem [resolvable:$true] %s333
          %339 = dma.hbm_to_vmem [thread:$0]  %s3, 256, %s334, [#allocation9], 64, 64, 4
        $region24: #{cosine_normalizer_poly_offset_fwd.1} parent=11 // pred_fallthru
          _
        // Predicated region
        $region25: #{cosine_normalizer_poly_offset_fwd.1} parent=11 // pred_check
          %p340 = pneg %p138
        $region26: #{cosine_normalizer_poly_offset_fwd.1} parent=11 // pred_check_branch
          %342 = sbr.rel (%p340) target = $region28
        $region27: #{cosine_normalizer_poly_offset_fwd.1} parent=11 // pred_region
          %s344 = ssub.s32 16, 16
          %345 = vsyncadd [#allocation9], %s344
          %s347 = sshll.u32 [#allocation10], 4
          %s348 = int_to_ptr.vmem [resolvable:$true] %s347
          %350 = dma.hbm_to_vmem [thread:$0]  %s4, 16, %s348, [#allocation9]
        $region28: #{cosine_normalizer_poly_offset_fwd.1} parent=11 // pred_fallthru
          _
        // Predicated region
        $region29: #{cosine_normalizer_poly_offset_fwd.1} parent=11 // pred_check
          %p351 = pneg %p159
        $region30: #{cosine_normalizer_poly_offset_fwd.1} parent=11 // pred_check_branch
          %353 = sbr.rel (%p351) target = $region32
        $region31: #{cosine_normalizer_poly_offset_fwd.1} parent=11 // pred_region
          %s355 = ssub.s32 16, 16
          %356 = vsyncadd [#allocation12], %s355
          %s358 = sshll.u32 [#allocation11], 4
          %s359 = int_to_ptr.vmem [resolvable:$true] %s358
          %361 = dma.hbm_to_vmem [thread:$0]  %s5, 16, %s359, [#allocation12]
        $region32: #{cosine_normalizer_poly_offset_fwd.1} parent=11 // pred_fallthru
          _
        // Predicated region
        $region33: #{cosine_normalizer_poly_offset_fwd.1} parent=11 // pred_check
          %p362 = pneg %p180
        $region34: #{cosine_normalizer_poly_offset_fwd.1} parent=11 // pred_check_branch
          %364 = sbr.rel (%p362) target = $region36
        $region35: #{cosine_normalizer_poly_offset_fwd.1} parent=11 // pred_region
          %s366 = ssub.s32 16, 16
          %367 = vsyncadd [#allocation12], %s366
          %s369 = sshll.u32 [#allocation13], 4
          %s370 = int_to_ptr.vmem [resolvable:$true] %s369
          %372 = dma.hbm_to_vmem [thread:$0]  %s6, 16, %s370, [#allocation12]
        $region36: #{cosine_normalizer_poly_offset_fwd.1} parent=11 // pred_fallthru
          _
        // Predicated region
        $region37: #{cosine_normalizer_poly_offset_fwd.1} parent=11 // pred_check
          %p373 = pneg %p201
        $region38: #{cosine_normalizer_poly_offset_fwd.1} parent=11 // pred_check_branch
          %375 = sbr.rel (%p373) target = $region40
        $region39: #{cosine_normalizer_poly_offset_fwd.1} parent=11 // pred_region
          %s377 = ssub.s32 1024, 1024
          %378 = vsyncadd [#allocation15], %s377
          %s379 = sshll.u32 [#allocation14], 4
          %s380 = int_to_ptr.vmem [resolvable:$true] %s379
          %385 = dma.hbm_to_vmem [thread:$0]  %s7, 1024, %s380, [#allocation15], 64, 64, 4
        $region40: #{cosine_normalizer_poly_offset_fwd.1} parent=11 // pred_fallthru
          _
        // Predicated region
        $region41: #{cosine_normalizer_poly_offset_fwd.1} parent=11 // pred_check
          %p386 = pneg %p222
        $region42: #{cosine_normalizer_poly_offset_fwd.1} parent=11 // pred_check_branch
          %388 = sbr.rel (%p386) target = $region44
        $region43: #{cosine_normalizer_poly_offset_fwd.1} parent=11 // pred_region
          %s390 = ssub.s32 16, 16
          %391 = vsyncadd [#allocation15], %s390
          %s393 = sshll.u32 [#allocation16], 4
          %s394 = int_to_ptr.vmem [resolvable:$true] %s393
          %396 = dma.hbm_to_vmem [thread:$0]  %s8, 16, %s394, [#allocation15]
        $region44: #{cosine_normalizer_poly_offset_fwd.1} parent=11 // pred_fallthru
          _
        // Predicated region
        $region45: #{cosine_normalizer_poly_offset_fwd.1} parent=11 // pred_check
          %p397 = pneg %p243
        $region46: #{cosine_normalizer_poly_offset_fwd.1} parent=11 // pred_check_branch
          %399 = sbr.rel (%p397) target = $region48
        $region47: #{cosine_normalizer_poly_offset_fwd.1} parent=11 // pred_region
          %s401 = ssub.s32 1024, 1024
          %402 = vsyncadd [#allocation18], %s401
          %s403 = sshll.u32 [#allocation17], 4
          %s404 = int_to_ptr.vmem [resolvable:$true] %s403
          %409 = dma.hbm_to_vmem [thread:$0]  %s9, 1024, %s404, [#allocation18], 64, 64, 4
        $region48: #{cosine_normalizer_poly_offset_fwd.1} parent=11 // pred_fallthru
          _
        // Predicated region
        $region49: #{cosine_normalizer_poly_offset_fwd.1} parent=11 // pred_check
          %p410 = pneg %p264
        $region50: #{cosine_normalizer_poly_offset_fwd.1} parent=11 // pred_check_branch
          %412 = sbr.rel (%p410) target = $region52
        $region51: #{cosine_normalizer_poly_offset_fwd.1} parent=11 // pred_region
          %s414 = ssub.s32 16, 16
          %415 = vsyncadd [#allocation18], %s414
          %s417 = sshll.u32 [#allocation19], 4
          %s418 = int_to_ptr.vmem [resolvable:$true] %s417
          %420 = dma.hbm_to_vmem [thread:$0]  %s10, 16, %s418, [#allocation18]
        $region52: #{cosine_normalizer_poly_offset_fwd.1} parent=11 // pred_fallthru
          _
      $region12: #{cosine_normalizer_poly_offset_fwd.1} parent=5 // pred_fallthru
        _
      %p421 = scmp.lt.s32.totalorder %s28, 2
      // Predicated region
      $region53: #{cosine_normalizer_poly_offset_fwd.1} parent=5 // pred_check
        %p422 = pneg %p421
      $region54: #{cosine_normalizer_poly_offset_fwd.1} parent=5 // pred_check_branch
        %424 = sbr.rel (%p422) target = $region56
      $region55: #{cosine_normalizer_poly_offset_fwd.1} parent=5 // pred_region
        // Predicated region
        $region57: #{cosine_normalizer_poly_offset_fwd.1} parent=55 // pred_check
          %p425 = pneg %p48
        $region58: #{cosine_normalizer_poly_offset_fwd.1} parent=55 // pred_check_branch
          %427 = sbr.rel (%p425) target = $region60
        $region59: #{cosine_normalizer_poly_offset_fwd.1} parent=55 // pred_region
          %s428 = sand.u32 %s38, 1
          %s429 = scalar_lea.sflag [#allocation3], %s428
          %s430 = sand.u32 %s38, 1
          %s431 = smul.addr %s430, 8
          %s432 = scalar_lea.vmem [#allocation2], %s431
          %s434 = ssub.s32 128, 128
          %435 = vsyncadd %s429, %s434
          %s436 = smul.addr %s28, 128
          %s437 = scalar_lea.hbm %s0, %s436
          %s439 = sshll.u32 %s432, 4
          %s440 = int_to_ptr.vmem [resolvable:$true] %s439
          %442 = dma.hbm_to_vmem [thread:$0]  %s437, 128, %s440, %s429
        $region60: #{cosine_normalizer_poly_offset_fwd.1} parent=55 // pred_fallthru
          _
      $region56: #{cosine_normalizer_poly_offset_fwd.1} parent=5 // pred_fallthru
        _
      %p443 = scmp.le.s32.totalorder 1, %s28
      %p444 = scmp.lt.s32.totalorder %s28, 3
      %p445 = pnand %p443, %p444
      %p446 = pneg %p445
      // Predicated region
      $region61: #{cosine_normalizer_poly_offset_fwd.1} parent=5 // pred_check
        _
      $region62: #{cosine_normalizer_poly_offset_fwd.1} parent=5 // pred_check_branch
        %448 = sbr.rel (%p445) target = $region64
      $region63: #{cosine_normalizer_poly_offset_fwd.1} parent=5 // pred_region
        %s449 = ssub.s32 %s28, 1
        %s450 = sand.u32 %s41, 1
        %s451 = scalar_lea.sflag [#allocation3], %s450
        %s452 = sand.u32 %s41, 1
        %s453 = smul.addr %s452, 8
        %s454 = scalar_lea.vmem [#allocation2], %s453
        // Predicated region
        $region65: #{cosine_normalizer_poly_offset_fwd.1} parent=63 // pred_check
          %p455 = pneg %p54
        $region66: #{cosine_normalizer_poly_offset_fwd.1} parent=63 // pred_check_branch
          %457 = sbr.rel (%p455) target = $region68
        $region67: #{cosine_normalizer_poly_offset_fwd.1} parent=63 // pred_region
          %458 = dma.done %s451, 128
        $region68: #{cosine_normalizer_poly_offset_fwd.1} parent=63 // pred_fallthru
          _
        // Predicated region
        $region69: #{cosine_normalizer_poly_offset_fwd.1} parent=63 // pred_check
          %p459 = pneg %p75
        $region70: #{cosine_normalizer_poly_offset_fwd.1} parent=63 // pred_check_branch
          %461 = sbr.rel (%p459) target = $region72
        $region71: #{cosine_normalizer_poly_offset_fwd.1} parent=63 // pred_region
          %462 = dma.done [#allocation6], 16
        $region72: #{cosine_normalizer_poly_offset_fwd.1} parent=63 // pred_fallthru
          _
        // Predicated region
        $region73: #{cosine_normalizer_poly_offset_fwd.1} parent=63 // pred_check
          %p463 = pneg %p96
        $region74: #{cosine_normalizer_poly_offset_fwd.1} parent=63 // pred_check_branch
          %465 = sbr.rel (%p463) target = $region76
        $region75: #{cosine_normalizer_poly_offset_fwd.1} parent=63 // pred_region
          %466 = dma.done [#allocation6], 16
        $region76: #{cosine_normalizer_poly_offset_fwd.1} parent=63 // pred_fallthru
          _
        // Predicated region
        $region77: #{cosine_normalizer_poly_offset_fwd.1} parent=63 // pred_check
          %p467 = pneg %p117
        $region78: #{cosine_normalizer_poly_offset_fwd.1} parent=63 // pred_check_branch
          %469 = sbr.rel (%p467) target = $region80
        $region79: #{cosine_normalizer_poly_offset_fwd.1} parent=63 // pred_region
          %470 = dma.done [#allocation9], 256
        $region80: #{cosine_normalizer_poly_offset_fwd.1} parent=63 // pred_fallthru
          _
        // Predicated region
        $region81: #{cosine_normalizer_poly_offset_fwd.1} parent=63 // pred_check
          %p471 = pneg %p138
        $region82: #{cosine_normalizer_poly_offset_fwd.1} parent=63 // pred_check_branch
          %473 = sbr.rel (%p471) target = $region84
        $region83: #{cosine_normalizer_poly_offset_fwd.1} parent=63 // pred_region
          %474 = dma.done [#allocation9], 16
        $region84: #{cosine_normalizer_poly_offset_fwd.1} parent=63 // pred_fallthru
          _
        // Predicated region
        $region85: #{cosine_normalizer_poly_offset_fwd.1} parent=63 // pred_check
          %p475 = pneg %p159
        $region86: #{cosine_normalizer_poly_offset_fwd.1} parent=63 // pred_check_branch
          %477 = sbr.rel (%p475) target = $region88
        $region87: #{cosine_normalizer_poly_offset_fwd.1} parent=63 // pred_region
          %478 = dma.done [#allocation12], 16
        $region88: #{cosine_normalizer_poly_offset_fwd.1} parent=63 // pred_fallthru
          _
        // Predicated region
        $region89: #{cosine_normalizer_poly_offset_fwd.1} parent=63 // pred_check
          %p479 = pneg %p180
        $region90: #{cosine_normalizer_poly_offset_fwd.1} parent=63 // pred_check_branch
          %481 = sbr.rel (%p479) target = $region92
        $region91: #{cosine_normalizer_poly_offset_fwd.1} parent=63 // pred_region
          %482 = dma.done [#allocation12], 16
        $region92: #{cosine_normalizer_poly_offset_fwd.1} parent=63 // pred_fallthru
          _
        // Predicated region
        $region93: #{cosine_normalizer_poly_offset_fwd.1} parent=63 // pred_check
          %p483 = pneg %p201
        $region94: #{cosine_normalizer_poly_offset_fwd.1} parent=63 // pred_check_branch
          %485 = sbr.rel (%p483) target = $region96
        $region95: #{cosine_normalizer_poly_offset_fwd.1} parent=63 // pred_region
          %486 = dma.done [#allocation15], 1024
        $region96: #{cosine_normalizer_poly_offset_fwd.1} parent=63 // pred_fallthru
          _
        // Predicated region
        $region97: #{cosine_normalizer_poly_offset_fwd.1} parent=63 // pred_check
          %p487 = pneg %p222
        $region98: #{cosine_normalizer_poly_offset_fwd.1} parent=63 // pred_check_branch
          %489 = sbr.rel (%p487) target = $region100
        $region99: #{cosine_normalizer_poly_offset_fwd.1} parent=63 // pred_region
          %490 = dma.done [#allocation15], 16
        $region100: #{cosine_normalizer_poly_offset_fwd.1} parent=63 // pred_fallthru
          _
        // Predicated region
        $region101: #{cosine_normalizer_poly_offset_fwd.1} parent=63 // pred_check
          %p491 = pneg %p243
        $region102: #{cosine_normalizer_poly_offset_fwd.1} parent=63 // pred_check_branch
          %493 = sbr.rel (%p491) target = $region104
        $region103: #{cosine_normalizer_poly_offset_fwd.1} parent=63 // pred_region
          %494 = dma.done [#allocation18], 1024
        $region104: #{cosine_normalizer_poly_offset_fwd.1} parent=63 // pred_fallthru
          _
        // Predicated region
        $region105: #{cosine_normalizer_poly_offset_fwd.1} parent=63 // pred_check
          %p495 = pneg %p264
        $region106: #{cosine_normalizer_poly_offset_fwd.1} parent=63 // pred_check_branch
          %497 = sbr.rel (%p495) target = $region108
        $region107: #{cosine_normalizer_poly_offset_fwd.1} parent=63 // pred_region
          %498 = dma.done [#allocation18], 16
        $region108: #{cosine_normalizer_poly_offset_fwd.1} parent=63 // pred_fallthru
          _
        %s499 = sand.u32 %s41, 1
        %s500 = scalar_lea.sflag [#allocation3], %s499
        %s501 = sand.u32 %s41, 1
        %s502 = smul.addr %s501, 8
        %s503 = scalar_lea.vmem [#allocation2], %s502
        %p504 = pneg %p54
        %p505 = pneg %p51
        %p506 = pneg %p75
        %p507 = pneg %p72
        %p508 = pneg %p96
        %p509 = pneg %p93
        %p510 = pneg %p117
        %p511 = pneg %p114
        %p512 = pneg %p138
        %p513 = pneg %p135
        %p514 = pneg %p159
        %p515 = pneg %p156
        %p516 = pneg %p180
        %p517 = pneg %p177
        %p518 = pneg %p201
        %p519 = pneg %p198
        %p520 = pneg %p222
        %p521 = pneg %p219
        %p522 = pneg %p243
        %p523 = pneg %p240
        %p524 = pneg %p264
        %p525 = pneg %p261
        %p526 = pneg %p290
        %p527 = pneg %p287
        %s528 = sand.u32 %s277, 1
        %s529 = scalar_lea.sflag [#allocation4], %s528
        %s530 = sand.u32 %s277, 1
        %s531 = smul.addr %s530, 8
        %s532 = scalar_lea.vmem [#allocation20], %s531
        %v534 = vld [vmem:[%s454] sm:$0xff]
        %v535 = vld [vmem:[#allocation5] sm:$0x1]
        %v536 = vld [vmem:[#allocation7] sm:$0x1]
        %vm537 = vcmask 261120
        %v538 = vsel %vm537, %v534, 0.0
        %539 = vadd.xlane.f32.xlu0 %v538
        %v540 = vpop.xlane.xlu0 %539
        %v541 = vmul.f32 %v534, %v534
        %v542 = vsel %vm537, %v541, 0.0
        %543 = vadd.xlane.f32.xlu0 %v542
        %v544 = vpop.xlane.xlu0 %543
        %v545 = vmul.f32 %v540, 0.03125
        %v546 = vmul.f32 %v544, 0.03125
        %v547 = vmul.f32 %v545, %v545
        %v548 = vsub.f32 %v546, %v547
        %v549 = vmax.f32 %v548, 0.0
        %v550 = vsub.f32 %v534, %v545
        %v551 = vadd.f32 %v549, 1e-05
        %v552 = vrsqrt.pop %v551
        %v553 = vmul.f32 %v550, %v552
        %v555 = vlaneseq
        %v556 = vshrl.u32 %v555, 7
        %v557 = vsub.s32 0, %v556
        %v558 = vrot.slane %v535, %v557
        %v560 = vmul.f32 %v553, %v558
        %v562 = vlaneseq
        %v563 = vshrl.u32 %v562, 7
        %v564 = vsub.s32 0, %v563
        %v565 = vrot.slane %v536, %v564
        %v567 = vadd.f32 %v560, %v565
        %v568 = vpack.c.bf16 %v567, %v567
        %v569 = vld [vmem:[#allocation8] sm:$0xf]
        %v570 = vld [vmem:[#allocation8 + $0x4] sm:$0xf]
        %v571 = vld [vmem:[#allocation8 + $0x8] sm:$0xf]
        %v572 = vld [vmem:[#allocation8 + $0xc] sm:$0xf]
        %v573 = vld [vmem:[#allocation10] sm:$0x1]
        %v575 = vlaneseq
        %v576 = vshrl.u32 %v575, 7
        %v577 = vsub.s32 0, %v576
        %v578 = vrot.slane %v573, %v577
        %v584 = vunpack.c.l.b16 %v569
        %v585 = vunpack.c.l.b16 %v570
        %v586 = vunpack.c.l.b16 %v571
        %v587 = vunpack.c.l.b16 %v572
        %v588 = vpack.c.b16 %v585, %v584
        %v589 = vpack.c.b16 %v587, %v586
        %v593 = vsel %vm537, %v568, 0
        %595 = vmatprep.subr.bf16.mxu0 0
        %596 = vmatpush1.bf16.msra.mxu0 %v588
        %597 = vmatprep.subr.bf16.mxu0 0
        %598 = vmatpush1.bf16.msra.mxu0 %v589
        %599 = vmatprep.subr.bf16.mxu0 0
        %600 = vmatpush1.bf16.msra.mxu0 0
        %601 = vmatprep.subr.bf16.mxu0 0
        %602 = vmatpush1.bf16.msra.mxu0 0
        %603 = vmatprep.subr.bf16.mxu0 0
        %604 = vmatpush1.bf16.msra.mxu0 0
        %605 = vmatprep.subr.bf16.mxu0 0
        %606 = vmatpush1.bf16.msra.mxu0 0
        %607 = vmatprep.subr.bf16.mxu0 0
        %608 = vmatpush1.bf16.msra.mxu0 0
        %609 = vmatprep.subr.bf16.mxu0 0
        %610 = vmatpush1.bf16.msra.mxu0 0
        %611 = vmatprep.subr.bf16.mxu0 0
        %612 = vmatpush1.bf16.msra.mxu0 0
        %613 = vmatprep.subr.bf16.mxu0 0
        %614 = vmatpush1.bf16.msra.mxu0 0
        %615 = vmatprep.subr.bf16.mxu0 0
        %616 = vmatpush1.bf16.msra.mxu0 0
        %617 = vmatprep.subr.bf16.mxu0 0
        %618 = vmatpush1.bf16.msra.mxu0 0
        %619 = vmatprep.subr.bf16.mxu0 0
        %620 = vmatpush1.bf16.msra.mxu0 0
        %621 = vmatprep.subr.bf16.mxu0 0
        %622 = vmatpush1.bf16.msra.mxu0 0
        %623 = vmatprep.subr.bf16.mxu0 0
        %624 = vmatpush1.bf16.msra.mxu0 0
        %625 = vmatprep.subr.bf16.mxu0 0
        %626 = vmatpush1.bf16.msra.mxu0 0
        %627 = vmatprep.mubr.bf16.mxu0 0
        %628 = vmatmul.mubr.bf16.gmra.mrb[0].mxu0 %v593
        %v629 = vpop.f32.mrb[0].mxu0
        %v630 = vadd.f32 %v578, %v629
        %v631 = vpop.f32.mrb[0].mxu0
        %v632 = vpop.f32.mrb[0].mxu0
        %v633 = vpop.f32.mrb[0].mxu0
        %634 = vdwg.mxu0
        %v635 = vmax.f32 %v630, 0.0
        %v636 = vld [vmem:[#allocation11] sm:$0x1]
        %v637 = vld [vmem:[#allocation13] sm:$0x1]
        %638 = vadd.xlane.f32.xlu0 %v635
        %v639 = vpop.xlane.xlu0 %638
        %v640 = vmul.f32 %v635, %v635
        %641 = vadd.xlane.f32.xlu0 %v640
        %v642 = vpop.xlane.xlu0 %641
        %v643 = vmul.f32 %v639, 0.0078125
        %v644 = vmul.f32 %v642, 0.0078125
        %v645 = vmul.f32 %v643, %v643
        %v646 = vsub.f32 %v644, %v645
        %v647 = vmax.f32 %v646, 0.0
        %v648 = vsub.f32 %v635, %v643
        %v649 = vadd.f32 %v647, 1e-05
        %v650 = vrsqrt.pop %v649
        %v651 = vmul.f32 %v648, %v650
        %v653 = vlaneseq
        %v654 = vshrl.u32 %v653, 7
        %v655 = vsub.s32 0, %v654
        %v656 = vrot.slane %v636, %v655
        %v658 = vmul.f32 %v651, %v656
        %v660 = vlaneseq
        %v661 = vshrl.u32 %v660, 7
        %v662 = vsub.s32 0, %v661
        %v663 = vrot.slane %v637, %v662
        %v665 = vadd.f32 %v658, %v663
        %v666 = vpack.c.bf16 %v665, %v665
        %v667 = vld [vmem:[#allocation14] sm:$0xf]
        %v668 = vld [vmem:[#allocation14 + $0x4] sm:$0xf]
        %v669 = vld [vmem:[#allocation14 + $0x8] sm:$0xf]
        %v670 = vld [vmem:[#allocation14 + $0xc] sm:$0xf]
        %v671 = vld [vmem:[#allocation14 + $0x10] sm:$0xf]
        %v672 = vld [vmem:[#allocation14 + $0x14] sm:$0xf]
        %v673 = vld [vmem:[#allocation14 + $0x18] sm:$0xf]
        %v674 = vld [vmem:[#allocation14 + $0x1c] sm:$0xf]
        %v675 = vld [vmem:[#allocation14 + $0x20] sm:$0xf]
        %v676 = vld [vmem:[#allocation14 + $0x24] sm:$0xf]
        %v677 = vld [vmem:[#allocation14 + $0x28] sm:$0xf]
        %v678 = vld [vmem:[#allocation14 + $0x2c] sm:$0xf]
        %v679 = vld [vmem:[#allocation14 + $0x30] sm:$0xf]
        %v680 = vld [vmem:[#allocation14 + $0x34] sm:$0xf]
        %v681 = vld [vmem:[#allocation14 + $0x38] sm:$0xf]
        %v682 = vld [vmem:[#allocation14 + $0x3c] sm:$0xf]
        %v683 = vld [vmem:[#allocation16] sm:$0x1]
        %v685 = vlaneseq
        %v686 = vshrl.u32 %v685, 7
        %v687 = vsub.s32 0, %v686
        %v688 = vrot.slane %v683, %v687
        %v706 = vunpack.c.l.b16 %v667
        %v707 = vunpack.c.l.b16 %v668
        %v708 = vunpack.c.l.b16 %v669
        %v709 = vunpack.c.l.b16 %v670
        %v710 = vunpack.c.l.b16 %v671
        %v711 = vunpack.c.l.b16 %v672
        %v712 = vunpack.c.l.b16 %v673
        %v713 = vunpack.c.l.b16 %v674
        %v714 = vunpack.c.l.b16 %v675
        %v715 = vunpack.c.l.b16 %v676
        %v716 = vunpack.c.l.b16 %v677
        %v717 = vunpack.c.l.b16 %v678
        %v718 = vunpack.c.l.b16 %v679
        %v719 = vunpack.c.l.b16 %v680
        %v720 = vunpack.c.l.b16 %v681
        %v721 = vunpack.c.l.b16 %v682
        %v722 = vpack.c.b16 %v707, %v706
        %v723 = vpack.c.b16 %v709, %v708
        %v724 = vpack.c.b16 %v711, %v710
        %v725 = vpack.c.b16 %v713, %v712
        %v726 = vpack.c.b16 %v715, %v714
        %v727 = vpack.c.b16 %v717, %v716
        %v728 = vpack.c.b16 %v719, %v718
        %v729 = vpack.c.b16 %v721, %v720
        %738 = vmatprep.subr.bf16.mxu0 0
        %739 = vmatpush1.bf16.msra.mxu0 %v722
        %740 = vmatprep.subr.bf16.mxu0 0
        %741 = vmatpush1.bf16.msra.mxu0 %v723
        %742 = vmatprep.subr.bf16.mxu0 0
        %743 = vmatpush1.bf16.msra.mxu0 %v724
        %744 = vmatprep.subr.bf16.mxu0 0
        %745 = vmatpush1.bf16.msra.mxu0 %v725
        %746 = vmatprep.subr.bf16.mxu0 0
        %747 = vmatpush1.bf16.msra.mxu0 %v726
        %748 = vmatprep.subr.bf16.mxu0 0
        %749 = vmatpush1.bf16.msra.mxu0 %v727
        %750 = vmatprep.subr.bf16.mxu0 0
        %751 = vmatpush1.bf16.msra.mxu0 %v728
        %752 = vmatprep.subr.bf16.mxu0 0
        %753 = vmatpush1.bf16.msra.mxu0 %v729
        %754 = vmatprep.subr.bf16.mxu0 0
        %755 = vmatpush1.bf16.msra.mxu0 0
        %756 = vmatprep.subr.bf16.mxu0 0
        %757 = vmatpush1.bf16.msra.mxu0 0
        %758 = vmatprep.subr.bf16.mxu0 0
        %759 = vmatpush1.bf16.msra.mxu0 0
        %760 = vmatprep.subr.bf16.mxu0 0
        %761 = vmatpush1.bf16.msra.mxu0 0
        %762 = vmatprep.subr.bf16.mxu0 0
        %763 = vmatpush1.bf16.msra.mxu0 0
        %764 = vmatprep.subr.bf16.mxu0 0
        %765 = vmatpush1.bf16.msra.mxu0 0
        %766 = vmatprep.subr.bf16.mxu0 0
        %767 = vmatpush1.bf16.msra.mxu0 0
        %768 = vmatprep.subr.bf16.mxu0 0
        %769 = vmatpush1.bf16.msra.mxu0 0
        %770 = vmatprep.mubr.bf16.mxu0 0
        %771 = vmatmul.mubr.bf16.gmra.mrb[0].mxu0 %v666
        %v772 = vpop.f32.mrb[0].mxu0
        %v773 = vadd.f32 %v688, %v772
        %v774 = vpop.f32.mrb[0].mxu0
        %v775 = vpop.f32.mrb[0].mxu0
        %v776 = vpop.f32.mrb[0].mxu0
        %777 = vdwg.mxu0
        %v778 = vmax.f32 %v773, 0.0
        %v779 = vpack.c.bf16 %v778, %v778
        %v780 = vld [vmem:[#allocation17] sm:$0xf]
        %v781 = vld [vmem:[#allocation17 + $0x4] sm:$0xf]
        %v782 = vld [vmem:[#allocation17 + $0x8] sm:$0xf]
        %v783 = vld [vmem:[#allocation17 + $0xc] sm:$0xf]
        %v784 = vld [vmem:[#allocation17 + $0x10] sm:$0xf]
        %v785 = vld [vmem:[#allocation17 + $0x14] sm:$0xf]
        %v786 = vld [vmem:[#allocation17 + $0x18] sm:$0xf]
        %v787 = vld [vmem:[#allocation17 + $0x1c] sm:$0xf]
        %v788 = vld [vmem:[#allocation17 + $0x20] sm:$0xf]
        %v789 = vld [vmem:[#allocation17 + $0x24] sm:$0xf]
        %v790 = vld [vmem:[#allocation17 + $0x28] sm:$0xf]
        %v791 = vld [vmem:[#allocation17 + $0x2c] sm:$0xf]
        %v792 = vld [vmem:[#allocation17 + $0x30] sm:$0xf]
        %v793 = vld [vmem:[#allocation17 + $0x34] sm:$0xf]
        %v794 = vld [vmem:[#allocation17 + $0x38] sm:$0xf]
        %v795 = vld [vmem:[#allocation17 + $0x3c] sm:$0xf]
        %v796 = vld [vmem:[#allocation19] sm:$0x1]
        %v798 = vlaneseq
        %v799 = vshrl.u32 %v798, 7
        %v800 = vsub.s32 0, %v799
        %v801 = vrot.slane %v796, %v800
        %v819 = vunpack.c.l.b16 %v780
        %v820 = vunpack.c.l.b16 %v781
        %v821 = vunpack.c.l.b16 %v782
        %v822 = vunpack.c.l.b16 %v783
        %v823 = vunpack.c.l.b16 %v784
        %v824 = vunpack.c.l.b16 %v785
        %v825 = vunpack.c.l.b16 %v786
        %v826 = vunpack.c.l.b16 %v787
        %v827 = vunpack.c.l.b16 %v788
        %v828 = vunpack.c.l.b16 %v789
        %v829 = vunpack.c.l.b16 %v790
        %v830 = vunpack.c.l.b16 %v791
        %v831 = vunpack.c.l.b16 %v792
        %v832 = vunpack.c.l.b16 %v793
        %v833 = vunpack.c.l.b16 %v794
        %v834 = vunpack.c.l.b16 %v795
        %v835 = vpack.c.b16 %v820, %v819
        %v836 = vpack.c.b16 %v822, %v821
        %v837 = vpack.c.b16 %v824, %v823
        %v838 = vpack.c.b16 %v826, %v825
        %v839 = vpack.c.b16 %v828, %v827
        %v840 = vpack.c.b16 %v830, %v829
        %v841 = vpack.c.b16 %v832, %v831
        %v842 = vpack.c.b16 %v834, %v833
        %851 = vmatprep.subr.bf16.mxu0 0
        %852 = vmatpush1.bf16.msra.mxu0 %v835
        %853 = vmatprep.subr.bf16.mxu0 0
        %854 = vmatpush1.bf16.msra.mxu0 %v836
        %855 = vmatprep.subr.bf16.mxu0 0
        %856 = vmatpush1.bf16.msra.mxu0 %v837
        %857 = vmatprep.subr.bf16.mxu0 0
        %858 = vmatpush1.bf16.msra.mxu0 %v838
        %859 = vmatprep.subr.bf16.mxu0 0
        %860 = vmatpush1.bf16.msra.mxu0 %v839
        %861 = vmatprep.subr.bf16.mxu0 0
        %862 = vmatpush1.bf16.msra.mxu0 %v840
        %863 = vmatprep.subr.bf16.mxu0 0
        %864 = vmatpush1.bf16.msra.mxu0 %v841
        %865 = vmatprep.subr.bf16.mxu0 0
        %866 = vmatpush1.bf16.msra.mxu0 %v842
        %867 = vmatprep.subr.bf16.mxu0 0
        %868 = vmatpush1.bf16.msra.mxu0 0
        %869 = vmatprep.subr.bf16.mxu0 0
        %870 = vmatpush1.bf16.msra.mxu0 0
        %871 = vmatprep.subr.bf16.mxu0 0
        %872 = vmatpush1.bf16.msra.mxu0 0
        %873 = vmatprep.subr.bf16.mxu0 0
        %874 = vmatpush1.bf16.msra.mxu0 0
        %875 = vmatprep.subr.bf16.mxu0 0
        %876 = vmatpush1.bf16.msra.mxu0 0
        %877 = vmatprep.subr.bf16.mxu0 0
        %878 = vmatpush1.bf16.msra.mxu0 0
        %879 = vmatprep.subr.bf16.mxu0 0
        %880 = vmatpush1.bf16.msra.mxu0 0
        %881 = vmatprep.subr.bf16.mxu0 0
        %882 = vmatpush1.bf16.msra.mxu0 0
        %883 = vmatprep.mubr.bf16.mxu0 0
        %884 = vmatmul.mubr.bf16.gmra.mrb[0].mxu0 %v779
        %v885 = vpop.f32.mrb[0].mxu0
        %v886 = vadd.f32 %v801, %v885
        %v887 = vpop.f32.mrb[0].mxu0
        %v888 = vpop.f32.mrb[0].mxu0
        %v889 = vpop.f32.mrb[0].mxu0
        %890 = vdwg.mxu0
        %891 = vst [vmem:[%s532] sm:$0xff] %v886
        %s892 = sand.u32 %s277, 1
        %s893 = scalar_lea.sflag [#allocation4], %s892
        %s894 = sand.u32 %s277, 1
        %s895 = smul.addr %s894, 8
        %s896 = scalar_lea.vmem [#allocation20], %s895
        // Predicated region
        $region109: #{cosine_normalizer_poly_offset_fwd.1} parent=63 // pred_check
          %p897 = pneg %p287
        $region110: #{cosine_normalizer_poly_offset_fwd.1} parent=63 // pred_check_branch
          %899 = sbr.rel (%p897) target = $region112
        $region111: #{cosine_normalizer_poly_offset_fwd.1} parent=63 // pred_region
          %s901 = ssub.s32 128, 128
          %902 = vsyncadd %s893, %s901
          %s903 = smul.addr %s33, 128
          %s904 = scalar_lea.hbm %s11, %s903
          %s906 = sshll.u32 %s896, 4
          %s907 = int_to_ptr.vmem [resolvable:$true] %s906
          %909 = dma.vmem_to_hbm [thread:$0]  %s907, 128, %s904, %s893
        $region112: #{cosine_normalizer_poly_offset_fwd.1} parent=63 // pred_fallthru
          _
      $region64: #{cosine_normalizer_poly_offset_fwd.1} parent=5 // pred_fallthru
        _
      %p910 = scmp.le.s32.totalorder 2, %s28
      // Predicated region
      $region113: #{cosine_normalizer_poly_offset_fwd.1} parent=5 // pred_check
        %p911 = pneg %p910
      $region114: #{cosine_normalizer_poly_offset_fwd.1} parent=5 // pred_check_branch
        %913 = sbr.rel (%p911) target = $region116
      $region115: #{cosine_normalizer_poly_offset_fwd.1} parent=5 // pred_region
        %s914 = ssub.s32 %s28, 2
        // Predicated region
        $region117: #{cosine_normalizer_poly_offset_fwd.1} parent=115 // pred_check
          %p915 = pneg %p293
        $region118: #{cosine_normalizer_poly_offset_fwd.1} parent=115 // pred_check_branch
          %917 = sbr.rel (%p915) target = $region120
        $region119: #{cosine_normalizer_poly_offset_fwd.1} parent=115 // pred_region
          %s918 = sand.u32 %s278, 1
          %s919 = scalar_lea.sflag [#allocation4], %s918
          %s920 = sand.u32 %s278, 1
          %s921 = smul.addr %s920, 8
          %s922 = scalar_lea.vmem [#allocation20], %s921
          %923 = dma.done %s919, 128
        $region120: #{cosine_normalizer_poly_offset_fwd.1} parent=115 // pred_fallthru
          _
      $region116: #{cosine_normalizer_poly_offset_fwd.1} parent=5 // pred_fallthru
        _
    $region6: #{cosine_normalizer_poly_offset_fwd.1} parent=1 // loop_footer
      %s32 = sadd.s32 1, %s28
    $region7: #{cosine_normalizer_poly_offset_fwd.1} parent=1 // loop_footer_branch
      %27 = sbr.rel target = $region3
    $region8: #{cosine_normalizer_poly_offset_fwd.1} parent=1 // loop_exit
      _
    %924 = vsyncpa [#allocation3], 1
    %s925 = scalar_lea.sflag [#allocation3], 1
    %926 = vsyncpa %s925, 1
    %927 = vsyncpa [#allocation6], 1
    %928 = vsyncpa [#allocation9], 1
    %929 = vsyncpa [#allocation12], 1
    %930 = vsyncpa [#allocation15], 1
    %931 = vsyncpa [#allocation18], 1
    %932 = vsyncpa [#allocation4], 1
    %s933 = scalar_lea.sflag [#allocation4], 1
    %934 = vsyncpa %s933, 1

</llo_original>
